<compile_context>
chip_gen: v6e
topology: v6e:2x2x1
jax: 0.10.0
libtpu: 0.0.40
codegen_flags: <defaults>
</compile_context>

<pallas_src>
import functools

import jax
import jax.numpy as jnp
from jax import lax
from jax.experimental import pallas as pl
from jax.experimental.pallas import tpu as pltpu


def _round_up(x, m):
    return ((x + m - 1) // m) * m


def _focal_loss_kernel(x_ref, t_ref, w_ref, o_ref, *, gamma, n_total, tile_n):
    """One batch-tile: weighted CE -> focal transform -> masked partial sum."""
    i = pl.program_id(0)

    x = x_ref[...].astype(jnp.float32)            # (TILE_N, C) logits (promoted in-kernel)
    t = t_ref[...]                                # (TILE_N, 1) int32 targets
    w = w_ref[...].astype(jnp.float32)            # (1, C) class weights

    tn, c = x.shape

    # Valid-row mask for the ragged last tile.
    row = lax.broadcasted_iota(jnp.int32, (tn, 1), 0) + i * tile_n
    valid = row < n_total                                          # (TILE_N, 1)

    # Numerically stable log-sum-exp over the class dim (lanes).
    m = jnp.max(x, axis=-1, keepdims=True)                         # (TILE_N, 1)
    lse = m + jnp.log(jnp.sum(jnp.exp(x - m), axis=-1, keepdims=True))

    # Fused one-hot gather of target logit + target class weight:
    #   ce_i = w[t_i] * (lse_i - x[i, t_i])
    col = lax.broadcasted_iota(jnp.int32, (tn, c), 1)              # (TILE_N, C)
    onehot = (col == t).astype(jnp.float32)                        # (TILE_N, C)
    ce = jnp.sum(onehot * (w * (lse - x)), axis=-1, keepdims=True)  # (TILE_N, 1)

    # Zero out padded rows (also neutralizes any garbage from OOB padding).
    ce = jnp.where(valid, ce, 0.0)

    # Focal transform.
    p = jnp.exp(-ce)
    q = jnp.maximum(1.0 - p, 0.0)      # guard tiny-negative roundoff before pow
    g = float(gamma)
    if g == int(g) and g >= 0:
        # Static integer gamma -> pure-VPU repeated multiply, exact, no NaN hazard.
        fw = jnp.ones_like(q)
        for _ in range(int(g)):
            fw = fw * q
    else:
        fw = q ** g
    focal = fw * ce

    # Per-tile partial sum; final mean happens in plain JAX.
    o_ref[...] = jnp.sum(focal).reshape(1, 1, 1)


def focal_loss_tpu(logits, targets, weight=None, gamma=0.0, tile_rows=None):
    """logits: (N, C) float, targets: (N,) int, weight: (C,) float or None."""
    n, c = logits.shape
    itemsize = jnp.dtype(logits.dtype).itemsize
    row_align = {4: 8, 2: 16, 1: 32}.get(itemsize, 8)

    if tile_rows is None:
        # ~8 MiB per logits tile (double-buffered -> ~16 MiB), capped at the
        # ~512-1024 row amortization plateau, never larger than (padded) N.
        budget = 8 * 1024 * 1024
        max_rows = max(row_align, (budget // max(1, c * itemsize)) // row_align * row_align)
        tile_n = min(max_rows, 1024, _round_up(n, row_align))
    else:
        tile_n = min(_round_up(int(tile_rows), row_align), _round_up(n, row_align))
    tile_n = max(tile_n, row_align)
    grid = pl.cdiv(n, tile_n)

    t2d = targets.reshape(n, 1).astype(jnp.int32)
    if weight is None:
        w2d = jnp.ones((1, c), jnp.float32)
    else:
        w2d = weight.reshape(1, c).astype(jnp.float32)

    kernel = functools.partial(
        _focal_loss_kernel, gamma=float(gamma), n_total=n, tile_n=tile_n
    )

    partials = pl.pallas_call(
        kernel,
        out_shape=jax.ShapeDtypeStruct((grid, 1, 1), jnp.float32),
        grid=(grid,),
        in_specs=[
            pl.BlockSpec((tile_n, c), lambda i: (i, 0)),   # logits tile (native dtype)
            pl.BlockSpec((tile_n, 1), lambda i: (i, 0)),   # targets tile
            pl.BlockSpec((1, c), lambda i: (0, 0)),        # class weights (resident)
        ],
        out_specs=pl.BlockSpec((1, 1, 1), lambda i: (i, 0, 0)),   # per-tile partial
        compiler_params=pltpu.CompilerParams(
            dimension_semantics=("parallel",),
            vmem_limit_bytes=48 * 1024 * 1024,
        ),
    )(logits, t2d, w2d)

    return jnp.sum(partials) / jnp.float32(n)


def _focal_loss_ref(logits, targets, weight, gamma):
    """Pure-JAX reference mirroring the PyTorch semantics."""
    logp = jax.nn.log_softmax(logits.astype(jnp.float32), axis=-1)
    ce = -jnp.take_along_axis(logp, targets[:, None], axis=-1)[:, 0]
    if weight is not None:
        ce = ce * weight[targets]
    p = jnp.exp(-ce)
    return jnp.mean((1.0 - p) ** gamma * ce)


if __name__ == "__main__":
    key = jax.random.PRNGKey(0)
    k_logit, k_tgt = jax.random.split(key)

    N, C = 200, 32          # small, but exercises a 4-step grid + ragged last tile
    GAMMA = 2.0

    logits = jax.random.normal(k_logit, (N, C), dtype=jnp.float32)
    targets = jax.random.randint(k_tgt, (N,), 0, C, dtype=jnp.int32)
    weight = jnp.linspace(0.5, 1.5, C, dtype=jnp.float32)

    # Weighted, gamma=2, forced 64-row tiles -> grid of 4 with a ragged tail.
    out = focal_loss_tpu(logits, targets, weight, GAMMA, tile_rows=64)
    out = jax.block_until_ready(out)
    ref = _focal_loss_ref(logits, targets, weight, GAMMA)
    assert jnp.allclose(out, ref, rtol=1e-5, atol=1e-5), (out, ref)

    # Unweighted, gamma=0 (plain CE mean), default tiling.
    out0 = focal_loss_tpu(logits, targets, None, 0.0)
    out0 = jax.block_until_ready(out0)
    ref0 = _focal_loss_ref(logits, targets, None, 0.0)
    assert jnp.allclose(out0, ref0, rtol=1e-5, atol=1e-5), (out0, ref0)

    print("KERNEL_OK")
</pallas_src>

<mosaic_0001>
module attributes {stable_mosaic.version = 11 : i64} {
  func.func @_focal_loss_kernel(%arg0: i32, %arg1: memref<64x32xf32, #tpu.memory_space<vmem>>, %arg2: memref<64x1xi32, #tpu.memory_space<vmem>>, %arg3: memref<1x32xf32, #tpu.memory_space<vmem>>, %arg4: memref<1x1x1xf32, #tpu.memory_space<vmem>>) attributes {dimension_semantics = [#tpu.dimension_semantics<parallel>], iteration_bounds = array<i64: 4>, scalar_prefetch = 0 : i64, scratch_operands = 0 : i64, tpu.core_type = #tpu.core_type<tc>, window_params = [{transform_indices = @transform_0, window_bounds = array<i64: 64, 32>}, {transform_indices = @transform_1, window_bounds = array<i64: 64, 1>}, {pipeline_mode = #tpu.pipeline_mode<synchronous>, transform_indices = @transform_2, window_bounds = array<i64: 1, 32>}, {transform_indices = @transform_3, window_bounds = array<i64: 1, 1, 1>}]} {
    %c0 = arith.constant 0 : index
    %c0_0 = arith.constant 0 : index
    %0 = vector.load %arg1[%c0, %c0_0] : memref<64x32xf32, #tpu.memory_space<vmem>>, vector<64x32xf32>
    %c0_1 = arith.constant 0 : index
    %c0_2 = arith.constant 0 : index
    %1 = vector.load %arg2[%c0_1, %c0_2] : memref<64x1xi32, #tpu.memory_space<vmem>>, vector<64x1xi32>
    %c0_3 = arith.constant 0 : index
    %c0_4 = arith.constant 0 : index
    %2 = vector.load %arg3[%c0_3, %c0_4] : memref<1x32xf32, #tpu.memory_space<vmem>>, vector<1x32xf32>
    %3 = tpu.iota {dimensions = array<i32: 0>} : vector<64x1xi32>
    %c64_i32 = arith.constant 64 : i32
    %4 = arith.muli %arg0, %c64_i32 : i32
    %5 = vector.broadcast %4 : i32 to vector<64x1xi32>
    %6 = arith.addi %3, %5 : vector<64x1xi32>
    %c200_i32 = arith.constant 200 : i32
    %7 = vector.broadcast %c200_i32 : i32 to vector<64x1xi32>
    %8 = arith.cmpi slt, %6, %7 : vector<64x1xi32>
    %cst = arith.constant dense<0xFF800000> : vector<64xf32>
    %9 = vector.multi_reduction <maximumf>, %0, %cst [1] : vector<64x32xf32> to vector<64xf32>
    %10 = vector.shape_cast %9 : vector<64xf32> to vector<64x1xf32>
    %11 = vector.broadcast %10 : vector<64x1xf32> to vector<64x32xf32>
    %12 = arith.subf %0, %11 : vector<64x32xf32>
    %13 = math.exp %12 : vector<64x32xf32>
    %cst_5 = arith.constant dense<0.000000e+00> : vector<64xf32>
    %14 = vector.multi_reduction <add>, %13, %cst_5 [1] : vector<64x32xf32> to vector<64xf32>
    %15 = vector.shape_cast %14 : vector<64xf32> to vector<64x1xf32>
    %16 = math.log %15 : vector<64x1xf32>
    %17 = arith.addf %10, %16 : vector<64x1xf32>
    %18 = tpu.iota {dimensions = array<i32: 1>} : vector<64x32xi32>
    %19 = vector.broadcast %1 : vector<64x1xi32> to vector<64x32xi32>
    %20 = arith.cmpi eq, %18, %19 : vector<64x32xi32>
    %21 = arith.extui %20 : vector<64x32xi1> to vector<64x32xi32>
    %22 = arith.sitofp %21 : vector<64x32xi32> to vector<64x32xf32>
    %23 = vector.broadcast %17 : vector<64x1xf32> to vector<64x32xf32>
    %24 = arith.subf %23, %0 : vector<64x32xf32>
    %25 = vector.broadcast %2 : vector<1x32xf32> to vector<64x32xf32>
    %26 = arith.mulf %25, %24 : vector<64x32xf32>
    %27 = arith.mulf %22, %26 : vector<64x32xf32>
    %cst_6 = arith.constant dense<0.000000e+00> : vector<64xf32>
    %28 = vector.multi_reduction <add>, %27, %cst_6 [1] : vector<64x32xf32> to vector<64xf32>
    %29 = vector.shape_cast %28 : vector<64xf32> to vector<64x1xf32>
    %cst_7 = arith.constant 0.000000e+00 : f32
    %30 = vector.broadcast %cst_7 : f32 to vector<64x1xf32>
    %31 = arith.select %8, %29, %30 : vector<64x1xi1>, vector<64x1xf32>
    %cst_8 = arith.constant 0.000000e+00 : f32
    %32 = vector.broadcast %cst_8 : f32 to vector<64x1xf32>
    %33 = arith.subf %32, %31 : vector<64x1xf32>
    %34 = math.exp %33 : vector<64x1xf32>
    %cst_9 = arith.constant 1.000000e+00 : f32
    %35 = vector.broadcast %cst_9 : f32 to vector<64x1xf32>
    %36 = arith.subf %35, %34 : vector<64x1xf32>
    %cst_10 = arith.constant 0.000000e+00 : f32
    %37 = vector.broadcast %cst_10 : f32 to vector<64x1xf32>
    %38 = arith.maximumf %36, %37 : vector<64x1xf32>
    %cst_11 = arith.constant 1.000000e+00 : f32
    %39 = vector.broadcast %cst_11 : f32 to vector<64x1xf32>
    %40 = arith.mulf %39, %38 : vector<64x1xf32>
    %41 = arith.mulf %40, %38 : vector<64x1xf32>
    %42 = arith.mulf %41, %31 : vector<64x1xf32>
    %43 = vector.shape_cast %42 : vector<64x1xf32> to vector<1x64x1xf32>
    %cst_12 = arith.constant dense<0.000000e+00> : vector<1xf32>
    %44 = vector.multi_reduction <add>, %43, %cst_12 [1, 2] : vector<1x64x1xf32> to vector<1xf32>
    %45 = vector.shape_cast %44 : vector<1xf32> to vector<1x1x1xf32>
    %46 = vector.extract %45[0, 0, 0] : f32 from vector<1x1x1xf32>
    %47 = vector.broadcast %46 : f32 to vector<1x1x1xf32>
    %c0_13 = arith.constant 0 : index
    %c0_14 = arith.constant 0 : index
    %c0_15 = arith.constant 0 : index
    %48 = vector.load %arg4[%c0_13, %c0_14, %c0_15] : memref<1x1x1xf32, #tpu.memory_space<vmem>>, vector<1x1x1xf32>
    tpu.vector_store %arg4[%c0_13, %c0_14, %c0_15], %47 {strides = array<i32>} : memref<1x1x1xf32, #tpu.memory_space<vmem>>, vector<1x1x1xf32>,
    return
  }
  func.func @transform_0(%arg0: i32) -> (i32, i32) {
    %c0_i32 = arith.constant 0 : i32
    %c0_i32_0 = arith.constant 0 : i32
    return %arg0, %c0_i32 : i32, i32
  }
  func.func @transform_1(%arg0: i32) -> (i32, i32) {
    %c0_i32 = arith.constant 0 : i32
    %c0_i32_0 = arith.constant 0 : i32
    return %arg0, %c0_i32 : i32, i32
  }
  func.func @transform_2(%arg0: i32) -> (i32, i32) {
    %c0_i32 = arith.constant 0 : i32
    %c0_i32_0 = arith.constant 0 : i32
    %c0_i32_1 = arith.constant 0 : i32
    return %c0_i32, %c0_i32_0 : i32, i32
  }
  func.func @transform_3(%arg0: i32) -> (i32, i32, i32) {
    %c0_i32 = arith.constant 0 : i32
    %c0_i32_0 = arith.constant 0 : i32
    %c0_i32_1 = arith.constant 0 : i32
    return %arg0, %c0_i32, %c0_i32_0 : i32, i32, i32
  }
}

</mosaic_0001>

<llo_original>
// kernel: tpu_custom_call.1
$region0: #{tpu_custom_call.1}
  #allocation0 [shape = 'u32[]', space=smem, size = 0x4, offset = 0x4, fixed_abs, tag = 'smem constant byte address 0x4 - core index']
  #allocation1 [shape = 'u32[144,128]{1,0:T(1,128)}', space=vmem, size = 0x12000, scoped, tag = 'internal scratch']
  %s0 = inlined_call_operand.vmem [shape: f32[200,32], index: 0, kind: input, shape index: {}]
  %s1 = inlined_call_operand.vmem [shape: s32[200,1], index: 1, kind: input, shape index: {}]
  %s2 = inlined_call_operand.vmem [shape: f32[1,32], index: 2, kind: input, shape index: {}]
  %s3 = inlined_call_operand.vmem [shape: f32[4,1,1], index: 3, kind: output, shape index: {}]
  %s4 = sld [smem:[#allocation0]]
  $region45: #{tpu_custom_call.1} parent=0
    _
  %s6 = ssub.s32 1, %s4
  %s7 = scalar_select 0, %s6, %s4
  loop: start=0, step=1, limit=6
  $region2: #{tpu_custom_call.1} parent=0 // loop_pre_header
    _
  $region3: #{tpu_custom_call.1} parent=0 // loop_header
    %s9 = sphi 0, %s13
    %p10 = scmp.ge.s32.totalorder %s9, 6
    %s19 = sphi 0, %s21
    %s22 = sphi 0, %s19
    %s23 = sphi 0, %s22
    %s39 = sphi 0, %s23
    %s45 = sphi 0, %s47
    %s48 = sphi 0, %s45
    %s49 = sphi 0, %s48
    %s65 = sphi 0, %s49
    %s69 = sphi 0, %s69
    %s71 = sphi 0, %s69
    %s72 = sphi 0, %s71
    %s86 = sphi 0, %s72
    %s92 = sphi 0, %s94
    %s95 = sphi 0, %s92
    %s96 = sphi 0, %s95
    %s112 = sphi 0, %s96
  $region4: #{tpu_custom_call.1} parent=0 // loop_header_branch
    %12 = sbr.rel (%p10) target = $region8
  $region5: #{tpu_custom_call.1} parent=0 // loop_body
    %s14 = ssub.s32 %s9, 1
    %s15 = ssub.s32 %s9, 2
    %s16 = sadd.s32 %s9, 1
    %s17 = ssub.s32 %s9, %s16
    %p18 = scmp.eq.s32.totalorder %s17, 0
    %s20 = sadd.s32 %s19, 1
    %s21 = scalar_select %p18, %s19, %s20
    %p24 = pneg %p18
    %p25 = scmp.eq.s32.totalorder %s9, 3
    %p26 = por %p24, %p25
    %p27 = scmp.ne.s32.totalorder %s19, %s22
    %p28 = scmp.eq.s32.totalorder %s9, 0
    %p29 = por %p27, %p28
    %p30 = scmp.ne.s32.totalorder %s19, %s22
    %p31 = scmp.eq.s32.totalorder %s14, 3
    %p32 = por %p30, %p31
    %p33 = scmp.ne.s32.totalorder %s22, %s23
    %p34 = scmp.eq.s32.totalorder %s14, 0
    %p35 = por %p33, %p34
    %p36 = scmp.ne.s32.totalorder %s22, %s23
    %p37 = scmp.eq.s32.totalorder %s15, 3
    %p38 = por %p36, %p37
    %p40 = scmp.ne.s32.totalorder %s23, %s39
    %p41 = scmp.eq.s32.totalorder %s15, 0
    %p42 = por %p40, %p41
    %s43 = ssub.s32 %s9, %s16
    %p44 = scmp.eq.s32.totalorder %s43, 0
    %s46 = sadd.s32 %s45, 1
    %s47 = scalar_select %p44, %s45, %s46
    %p50 = pneg %p44
    %p51 = scmp.eq.s32.totalorder %s9, 3
    %p52 = por %p50, %p51
    %p53 = scmp.ne.s32.totalorder %s45, %s48
    %p54 = scmp.eq.s32.totalorder %s9, 0
    %p55 = por %p53, %p54
    %p56 = scmp.ne.s32.totalorder %s45, %s48
    %p57 = scmp.eq.s32.totalorder %s14, 3
    %p58 = por %p56, %p57
    %p59 = scmp.ne.s32.totalorder %s48, %s49
    %p60 = scmp.eq.s32.totalorder %s14, 0
    %p61 = por %p59, %p60
    %p62 = scmp.ne.s32.totalorder %s48, %s49
    %p63 = scmp.eq.s32.totalorder %s15, 3
    %p64 = por %p62, %p63
    %p66 = scmp.ne.s32.totalorder %s49, %s65
    %p67 = scmp.eq.s32.totalorder %s15, 0
    %p68 = por %p66, %p67
    %s70 = sadd.s32 %s69, 1
    %p73 = scmp.eq.s32.totalorder %s9, 3
    %p74 = scmp.ne.s32.totalorder %s69, %s71
    %p75 = scmp.eq.s32.totalorder %s9, 0
    %p76 = por %p74, %p75
    %p77 = scmp.ne.s32.totalorder %s69, %s71
    %p78 = scmp.eq.s32.totalorder %s14, 3
    %p79 = por %p77, %p78
    %p80 = scmp.ne.s32.totalorder %s71, %s72
    %p81 = scmp.eq.s32.totalorder %s14, 0
    %p82 = por %p80, %p81
    %p83 = scmp.ne.s32.totalorder %s71, %s72
    %p84 = scmp.eq.s32.totalorder %s15, 3
    %p85 = por %p83, %p84
    %p87 = scmp.ne.s32.totalorder %s72, %s86
    %p88 = scmp.eq.s32.totalorder %s15, 0
    %p89 = por %p87, %p88
    %s90 = ssub.s32 %s9, %s16
    %p91 = scmp.eq.s32.totalorder %s90, 0
    %s93 = sadd.s32 %s92, 1
    %s94 = scalar_select %p91, %s92, %s93
    %p97 = pneg %p91
    %p98 = scmp.eq.s32.totalorder %s9, 3
    %p99 = por %p97, %p98
    %p100 = scmp.ne.s32.totalorder %s92, %s95
    %p101 = scmp.eq.s32.totalorder %s9, 0
    %p102 = por %p100, %p101
    %p103 = scmp.ne.s32.totalorder %s92, %s95
    %p104 = scmp.eq.s32.totalorder %s14, 3
    %p105 = por %p103, %p104
    %p106 = scmp.ne.s32.totalorder %s95, %s96
    %p107 = scmp.eq.s32.totalorder %s14, 0
    %p108 = por %p106, %p107
    %p109 = scmp.ne.s32.totalorder %s95, %s96
    %p110 = scmp.eq.s32.totalorder %s15, 3
    %p111 = por %p109, %p110
    %p113 = scmp.ne.s32.totalorder %s96, %s112
    %p114 = scmp.eq.s32.totalorder %s15, 0
    %p115 = por %p113, %p114
    %p116 = scmp.le.s32.totalorder 1, %s9
    %p117 = scmp.lt.s32.totalorder %s9, 5
    %p118 = pnand %p116, %p117
    %p119 = pneg %p118
    // Predicated region
    $region9: #{tpu_custom_call.1} parent=5 // pred_check
      _
    $region10: #{tpu_custom_call.1} parent=5 // pred_check_branch
      %121 = sbr.rel (%p118) target = $region12
    $region11: #{tpu_custom_call.1} parent=5 // pred_region
      %s122 = ssub.s32 %s9, 1
      // Predicated region
      $region13: #{tpu_custom_call.1} parent=11 // pred_check
        %p123 = pneg %p82
      $region14: #{tpu_custom_call.1} parent=11 // pred_check_branch
        %125 = sbr.rel (%p123) target = $region16
      $region15: #{tpu_custom_call.1} parent=11 // pred_region
        _
      $region16: #{tpu_custom_call.1} parent=11 // pred_fallthru
        _
    $region12: #{tpu_custom_call.1} parent=5 // pred_fallthru
      _
    %p126 = scmp.lt.s32.totalorder %s9, 4
    // Predicated region
    $region17: #{tpu_custom_call.1} parent=5 // pred_check
      %p127 = pneg %p126
    $region18: #{tpu_custom_call.1} parent=5 // pred_check_branch
      %129 = sbr.rel (%p127) target = $region20
    $region19: #{tpu_custom_call.1} parent=5 // pred_region
      // Predicated region
      $region21: #{tpu_custom_call.1} parent=19 // pred_check
        %p130 = pneg %p29
      $region22: #{tpu_custom_call.1} parent=19 // pred_check_branch
        %132 = sbr.rel (%p130) target = $region24
      $region23: #{tpu_custom_call.1} parent=19 // pred_region
        %s133 = smul.u32 8, %s9
        %s134 = ssub.s32 25, %s133
        %p135 = scmp.lt.s32.totalorder %s134, 8
        %s136 = scalar_select %p135, %s134, 8
        %s137 = smul.u32 128, %s136
        %p138 = scmp.lt.s32.totalorder %s133, 24
        %s139 = scalar_select %p138, %s133, 24
        %s140 = smul.addr %s139, 8
        %s141 = scalar_lea.vmem %s0, %s140
        %s142 = smul.u32 8, %s9
        %s143 = ssub.s32 25, %s142
        %p144 = scmp.lt.s32.totalorder %s143, 8
        %s145 = scalar_select %p144, %s143, 8
        %s146 = smul.u32 128, %s145
      $region24: #{tpu_custom_call.1} parent=19 // pred_fallthru
        _
      // Predicated region
      $region25: #{tpu_custom_call.1} parent=19 // pred_check
        %p147 = pneg %p55
      $region26: #{tpu_custom_call.1} parent=19 // pred_check_branch
        %149 = sbr.rel (%p147) target = $region28
      $region27: #{tpu_custom_call.1} parent=19 // pred_region
        %s150 = smul.u32 8, %s9
        %s151 = ssub.s32 25, %s150
        %p152 = scmp.lt.s32.totalorder %s151, 8
        %s153 = scalar_select %p152, %s151, 8
        %s154 = smul.u32 128, %s153
        %p155 = scmp.lt.s32.totalorder %s150, 24
        %s156 = scalar_select %p155, %s150, 24
        %s157 = smul.addr %s156, 8
        %s158 = scalar_lea.vmem %s1, %s157
        %s159 = smul.u32 8, %s9
        %s160 = ssub.s32 25, %s159
        %p161 = scmp.lt.s32.totalorder %s160, 8
        %s162 = scalar_select %p161, %s160, 8
        %s163 = smul.u32 128, %s162
      $region28: #{tpu_custom_call.1} parent=19 // pred_fallthru
        _
    $region20: #{tpu_custom_call.1} parent=5 // pred_fallthru
      _
    %p164 = scmp.le.s32.totalorder 1, %s9
    %p165 = scmp.lt.s32.totalorder %s9, 5
    %p166 = pnand %p164, %p165
    %p167 = pneg %p166
    // Predicated region
    $region29: #{tpu_custom_call.1} parent=5 // pred_check
      _
    $region30: #{tpu_custom_call.1} parent=5 // pred_check_branch
      %169 = sbr.rel (%p166) target = $region32
    $region31: #{tpu_custom_call.1} parent=5 // pred_region
      %s170 = ssub.s32 %s9, 1
      %s171 = smul.u32 8, %s14
      %s172 = ssub.s32 25, %s171
      %p173 = scmp.lt.s32.totalorder %s172, 8
      %s174 = scalar_select %p173, %s172, 8
      %s175 = smul.u32 128, %s174
      %p176 = scmp.lt.s32.totalorder %s171, 24
      %s177 = scalar_select %p176, %s171, 24
      %s178 = smul.addr %s177, 8
      %s179 = scalar_lea.vmem %s0, %s178
      %p180 = pneg %p35
      %p181 = pneg %p32
      %s182 = smul.u32 8, %s14
      %s183 = ssub.s32 25, %s182
      %p184 = scmp.lt.s32.totalorder %s183, 8
      %s185 = scalar_select %p184, %s183, 8
      %s186 = smul.u32 128, %s185
      %p187 = scmp.lt.s32.totalorder %s182, 24
      %s188 = scalar_select %p187, %s182, 24
      %s189 = smul.addr %s188, 8
      %s190 = scalar_lea.vmem %s1, %s189
      %p191 = pneg %p61
      %p192 = pneg %p58
      %p193 = pneg %p82
      %p194 = pneg %p79
      %p195 = pneg %p108
      %p196 = pneg %p105
      %p197 = scmp.lt.s32.totalorder %s14, 3
      %s198 = scalar_select %p197, %s14, 3
      %s199 = scalar_lea.vmem %s3, %s198
      %s200 = smul.u32 8, %s14
      %s201 = ssub.s32 25, %s200
      %p202 = scmp.lt.s32.totalorder %s201, 8
      %s203 = scalar_select %p202, %s201, 8
      %s204 = smul.u32 128, %s203
      %p205 = scmp.lt.s32.totalorder %s200, 24
      %s206 = scalar_select %p205, %s200, 24
      %s207 = smul.addr %s206, 8
      %s208 = scalar_lea.vmem %s0, %s207
      %s209 = smul.u32 8, %s14
      %s210 = ssub.s32 25, %s209
      %p211 = scmp.lt.s32.totalorder %s210, 8
      %s212 = scalar_select %p211, %s210, 8
      %s213 = smul.u32 128, %s212
      %s214 = smul.u32 8, %s14
      %s215 = ssub.s32 25, %s214
      %p216 = scmp.lt.s32.totalorder %s215, 8
      %s217 = scalar_select %p216, %s215, 8
      %s218 = smul.u32 128, %s217
      %p219 = scmp.lt.s32.totalorder %s214, 24
      %s220 = scalar_select %p219, %s214, 24
      %s221 = smul.addr %s220, 8
      %s222 = scalar_lea.vmem %s1, %s221
      %s223 = smul.u32 8, %s14
      %s224 = ssub.s32 25, %s223
      %p225 = scmp.lt.s32.totalorder %s224, 8
      %s226 = scalar_select %p225, %s224, 8
      %s227 = smul.u32 128, %s226
      %p228 = scmp.lt.s32.totalorder %s14, 3
      %s229 = scalar_select %p228, %s14, 3
      %s230 = scalar_lea.vmem %s3, %s229
      %v231 = vld [vmem:[%s208] sm:$0xff]
      %v232 = vld [vmem:[%s208 + $0x8] sm:$0xff]
      %v233 = vld [vmem:[%s208 + $0x10] sm:$0xff]
      %v234 = vld [vmem:[%s208 + $0x18] sm:$0xff]
      %v235 = vld [vmem:[%s208 + $0x20] sm:$0xff]
      %v236 = vld [vmem:[%s208 + $0x28] sm:$0xff]
      %v237 = vld [vmem:[%s208 + $0x30] sm:$0xff]
      %v238 = vld [vmem:[%s208 + $0x38] sm:$0xff]
      %v239 = vld [vmem:[%s222] sm:$0xff]
      %v240 = vld [vmem:[%s222 + $0x8] sm:$0xff]
      %v241 = vld [vmem:[%s222 + $0x10] sm:$0xff]
      %v242 = vld [vmem:[%s222 + $0x18] sm:$0xff]
      %v243 = vld [vmem:[%s222 + $0x20] sm:$0xff]
      %v244 = vld [vmem:[%s222 + $0x28] sm:$0xff]
      %v245 = vld [vmem:[%s222 + $0x30] sm:$0xff]
      %v246 = vld [vmem:[%s222 + $0x38] sm:$0xff]
      %v247 = vld [vmem:[%s2] sm:$0x1]
      %v248 = vlaneseq
      %v249 = vshrl.u32 %v248, 7
      %v250 = vadd.s32 %v249, 8
      %v251 = vadd.s32 %v249, 16
      %v252 = vadd.s32 %v249, 24
      %v253 = vadd.s32 %v249, 32
      %v254 = vadd.s32 %v249, 40
      %v255 = vadd.s32 %v249, 48
      %v256 = vadd.s32 %v249, 56
      %s257 = smul.u32 %s14, 64
      %v258 = vstv %s257
      %v259 = vadd.s32 %v249, %v258
      %v260 = vadd.s32 %v250, %v258
      %v261 = vadd.s32 %v251, %v258
      %v262 = vadd.s32 %v252, %v258
      %v263 = vadd.s32 %v253, %v258
      %v264 = vadd.s32 %v254, %v258
      %v265 = vadd.s32 %v255, %v258
      %v266 = vadd.s32 %v256, %v258
      %vm267 = vcmp.lt.s32.totalorder %v259, 200
      %vm268 = vcmp.lt.s32.totalorder %v260, 200
      %vm269 = vcmp.lt.s32.totalorder %v261, 200
      %vm270 = vcmp.lt.s32.totalorder %v262, 200
      %vm271 = vcmp.lt.s32.totalorder %v263, 200
      %vm272 = vcmp.lt.s32.totalorder %v264, 200
      %vm273 = vcmp.lt.s32.totalorder %v265, 200
      %vm274 = vcmp.lt.s32.totalorder %v266, 200
      %vm275 = vcmask 261120
      %v276 = vsel %vm275, %v231, -inf
      %277 = vmax.xlane.f32.xlu0 %v276
      %v278 = vpop.xlane.xlu0 %277
      %v279 = vsel %vm275, %v232, -inf
      %280 = vmax.xlane.f32.xlu0 %v279
      %v281 = vpop.xlane.xlu0 %280
      %v282 = vsel %vm275, %v233, -inf
      %283 = vmax.xlane.f32.xlu0 %v282
      %v284 = vpop.xlane.xlu0 %283
      %v285 = vsel %vm275, %v234, -inf
      %286 = vmax.xlane.f32.xlu0 %v285
      %v287 = vpop.xlane.xlu0 %286
      %v288 = vsel %vm275, %v235, -inf
      %289 = vmax.xlane.f32.xlu0 %v288
      %v290 = vpop.xlane.xlu0 %289
      %v291 = vsel %vm275, %v236, -inf
      %292 = vmax.xlane.f32.xlu0 %v291
      %v293 = vpop.xlane.xlu0 %292
      %v294 = vsel %vm275, %v237, -inf
      %295 = vmax.xlane.f32.xlu0 %v294
      %v296 = vpop.xlane.xlu0 %295
      %v297 = vsel %vm275, %v238, -inf
      %298 = vmax.xlane.f32.xlu0 %v297
      %v299 = vpop.xlane.xlu0 %298
      %v300 = vsub.f32 %v231, %v278
      %v301 = vsub.f32 %v232, %v281
      %v302 = vsub.f32 %v233, %v284
      %v303 = vsub.f32 %v234, %v287
      %v304 = vsub.f32 %v235, %v290
      %v305 = vsub.f32 %v236, %v293
      %v306 = vsub.f32 %v237, %v296
      %v307 = vsub.f32 %v238, %v299
      %v308 = vmul.f32 %v300, 1.442695
      %v309 = vpow.pop %v308
      %v310 = vmul.f32 %v301, 1.442695
      %v311 = vpow.pop %v310
      %v312 = vmul.f32 %v302, 1.442695
      %v313 = vpow.pop %v312
      %v314 = vmul.f32 %v303, 1.442695
      %v315 = vpow.pop %v314
      %v316 = vmul.f32 %v304, 1.442695
      %v317 = vpow.pop %v316
      %v318 = vmul.f32 %v305, 1.442695
      %v319 = vpow.pop %v318
      %v320 = vmul.f32 %v306, 1.442695
      %v321 = vpow.pop %v320
      %v322 = vmul.f32 %v307, 1.442695
      %v323 = vpow.pop %v322
      %v324 = vsel %vm275, %v309, 0.0
      %325 = vadd.xlane.f32.xlu0 %v324
      %v326 = vpop.xlane.xlu0 %325
      %v327 = vsel %vm275, %v311, 0.0
      %328 = vadd.xlane.f32.xlu0 %v327
      %v329 = vpop.xlane.xlu0 %328
      %v330 = vsel %vm275, %v313, 0.0
      %331 = vadd.xlane.f32.xlu0 %v330
      %v332 = vpop.xlane.xlu0 %331
      %v333 = vsel %vm275, %v315, 0.0
      %334 = vadd.xlane.f32.xlu0 %v333
      %v335 = vpop.xlane.xlu0 %334
      %v336 = vsel %vm275, %v317, 0.0
      %337 = vadd.xlane.f32.xlu0 %v336
      %v338 = vpop.xlane.xlu0 %337
      %v339 = vsel %vm275, %v319, 0.0
      %340 = vadd.xlane.f32.xlu0 %v339
      %v341 = vpop.xlane.xlu0 %340
      %v342 = vsel %vm275, %v321, 0.0
      %343 = vadd.xlane.f32.xlu0 %v342
      %v344 = vpop.xlane.xlu0 %343
      %v345 = vsel %vm275, %v323, 0.0
      %346 = vadd.xlane.f32.xlu0 %v345
      %v347 = vpop.xlane.xlu0 %346
      %v348 = vlog2.pop %v326
      %v349 = vmul.f32 %v348, 0.6931472
      %v350 = vlog2.pop %v329
      %v351 = vmul.f32 %v350, 0.6931472
      %v352 = vlog2.pop %v332
      %v353 = vmul.f32 %v352, 0.6931472
      %v354 = vlog2.pop %v335
      %v355 = vmul.f32 %v354, 0.6931472
      %v356 = vlog2.pop %v338
      %v357 = vmul.f32 %v356, 0.6931472
      %v358 = vlog2.pop %v341
      %v359 = vmul.f32 %v358, 0.6931472
      %v360 = vlog2.pop %v344
      %v361 = vmul.f32 %v360, 0.6931472
      %v362 = vlog2.pop %v347
      %v363 = vmul.f32 %v362, 0.6931472
      %v364 = vadd.f32 %v278, %v349
      %v365 = vadd.f32 %v281, %v351
      %v366 = vadd.f32 %v284, %v353
      %v367 = vadd.f32 %v287, %v355
      %v368 = vadd.f32 %v290, %v357
      %v369 = vadd.f32 %v293, %v359
      %v370 = vadd.f32 %v296, %v361
      %v371 = vadd.f32 %v299, %v363
      %v372 = vlaneseq
      %v373 = vand.u32 %v372, 127
      %374 = vset.pattern.permute.xlu0 0
      %375 = vperm.xlu0 %374, %v239
      %v376 = vpop.permute.xlu0 %375
      %377 = vset.pattern.permute.xlu0 0
      %378 = vperm.xlu0 %377, %v240
      %v379 = vpop.permute.xlu0 %378
      %380 = vset.pattern.permute.xlu0 0
      %381 = vperm.xlu0 %380, %v241
      %v382 = vpop.permute.xlu0 %381
      %383 = vset.pattern.permute.xlu0 0
      %384 = vperm.xlu0 %383, %v242
      %v385 = vpop.permute.xlu0 %384
      %386 = vset.pattern.permute.xlu0 0
      %387 = vperm.xlu0 %386, %v243
      %v388 = vpop.permute.xlu0 %387
      %389 = vset.pattern.permute.xlu0 0
      %390 = vperm.xlu0 %389, %v244
      %v391 = vpop.permute.xlu0 %390
      %392 = vset.pattern.permute.xlu0 0
      %393 = vperm.xlu0 %392, %v245
      %v394 = vpop.permute.xlu0 %393
      %395 = vset.pattern.permute.xlu0 0
      %396 = vperm.xlu0 %395, %v246
      %v397 = vpop.permute.xlu0 %396
      %vm398 = vcmp.eq.s32.totalorder %v373, %v376
      %vm399 = vcmp.eq.s32.totalorder %v373, %v379
      %vm400 = vcmp.eq.s32.totalorder %v373, %v382
      %vm401 = vcmp.eq.s32.totalorder %v373, %v385
      %vm402 = vcmp.eq.s32.totalorder %v373, %v388
      %vm403 = vcmp.eq.s32.totalorder %v373, %v391
      %vm404 = vcmp.eq.s32.totalorder %v373, %v394
      %vm405 = vcmp.eq.s32.totalorder %v373, %v397
      %v406 = vsel %vm398, 1, 0
      %v407 = vsel %vm399, 1, 0
      %v408 = vsel %vm400, 1, 0
      %v409 = vsel %vm401, 1, 0
      %v410 = vsel %vm402, 1, 0
      %v411 = vsel %vm403, 1, 0
      %v412 = vsel %vm404, 1, 0
      %v413 = vsel %vm405, 1, 0
      %v414 = vcvt.s32.f32 %v406
      %v415 = vcvt.s32.f32 %v407
      %v416 = vcvt.s32.f32 %v408
      %v417 = vcvt.s32.f32 %v409
      %v418 = vcvt.s32.f32 %v410
      %v419 = vcvt.s32.f32 %v411
      %v420 = vcvt.s32.f32 %v412
      %v421 = vcvt.s32.f32 %v413
      %v422 = vsub.f32 %v364, %v231
      %v423 = vsub.f32 %v365, %v232
      %v424 = vsub.f32 %v366, %v233
      %v425 = vsub.f32 %v367, %v234
      %v426 = vsub.f32 %v368, %v235
      %v427 = vsub.f32 %v369, %v236
      %v428 = vsub.f32 %v370, %v237
      %v429 = vsub.f32 %v371, %v238
      %v431 = vlaneseq
      %v432 = vshrl.u32 %v431, 7
      %v433 = vsub.s32 0, %v432
      %v434 = vrot.slane %v247, %v433
      %v436 = vmul.f32 %v434, %v422
      %v437 = vmul.f32 %v434, %v423
      %v438 = vmul.f32 %v434, %v424
      %v439 = vmul.f32 %v434, %v425
      %v440 = vmul.f32 %v434, %v426
      %v441 = vmul.f32 %v434, %v427
      %v442 = vmul.f32 %v434, %v428
      %v443 = vmul.f32 %v434, %v429
      %v444 = vmul.f32 %v414, %v436
      %v445 = vmul.f32 %v415, %v437
      %v446 = vmul.f32 %v416, %v438
      %v447 = vmul.f32 %v417, %v439
      %v448 = vmul.f32 %v418, %v440
      %v449 = vmul.f32 %v419, %v441
      %v450 = vmul.f32 %v420, %v442
      %v451 = vmul.f32 %v421, %v443
      %v452 = vsel %vm275, %v444, 0.0
      %453 = vadd.xlane.f32.xlu0 %v452
      %v454 = vpop.xlane.xlu0 %453
      %v455 = vsel %vm275, %v445, 0.0
      %456 = vadd.xlane.f32.xlu0 %v455
      %v457 = vpop.xlane.xlu0 %456
      %v458 = vsel %vm275, %v446, 0.0
      %459 = vadd.xlane.f32.xlu0 %v458
      %v460 = vpop.xlane.xlu0 %459
      %v461 = vsel %vm275, %v447, 0.0
      %462 = vadd.xlane.f32.xlu0 %v461
      %v463 = vpop.xlane.xlu0 %462
      %v464 = vsel %vm275, %v448, 0.0
      %465 = vadd.xlane.f32.xlu0 %v464
      %v466 = vpop.xlane.xlu0 %465
      %v467 = vsel %vm275, %v449, 0.0
      %468 = vadd.xlane.f32.xlu0 %v467
      %v469 = vpop.xlane.xlu0 %468
      %v470 = vsel %vm275, %v450, 0.0
      %471 = vadd.xlane.f32.xlu0 %v470
      %v472 = vpop.xlane.xlu0 %471
      %v473 = vsel %vm275, %v451, 0.0
      %474 = vadd.xlane.f32.xlu0 %v473
      %v475 = vpop.xlane.xlu0 %474
      %v476 = vsel %vm267, %v454, 0.0
      %v477 = vsel %vm268, %v457, 0.0
      %v478 = vsel %vm269, %v460, 0.0
      %v479 = vsel %vm270, %v463, 0.0
      %v480 = vsel %vm271, %v466, 0.0
      %v481 = vsel %vm272, %v469, 0.0
      %v482 = vsel %vm273, %v472, 0.0
      %v483 = vsel %vm274, %v475, 0.0
      %v484 = vsub.f32 0.0, %v476
      %v485 = vsub.f32 0.0, %v477
      %v486 = vsub.f32 0.0, %v478
      %v487 = vsub.f32 0.0, %v479
      %v488 = vsub.f32 0.0, %v480
      %v489 = vsub.f32 0.0, %v481
      %v490 = vsub.f32 0.0, %v482
      %v491 = vsub.f32 0.0, %v483
      %v492 = vmul.f32 %v484, 1.442695
      %v493 = vpow.pop %v492
      %v494 = vmul.f32 %v485, 1.442695
      %v495 = vpow.pop %v494
      %v496 = vmul.f32 %v486, 1.442695
      %v497 = vpow.pop %v496
      %v498 = vmul.f32 %v487, 1.442695
      %v499 = vpow.pop %v498
      %v500 = vmul.f32 %v488, 1.442695
      %v501 = vpow.pop %v500
      %v502 = vmul.f32 %v489, 1.442695
      %v503 = vpow.pop %v502
      %v504 = vmul.f32 %v490, 1.442695
      %v505 = vpow.pop %v504
      %v506 = vmul.f32 %v491, 1.442695
      %v507 = vpow.pop %v506
      %v508 = vsub.f32 1.0, %v493
      %v509 = vsub.f32 1.0, %v495
      %v510 = vsub.f32 1.0, %v497
      %v511 = vsub.f32 1.0, %v499
      %v512 = vsub.f32 1.0, %v501
      %v513 = vsub.f32 1.0, %v503
      %v514 = vsub.f32 1.0, %v505
      %v515 = vsub.f32 1.0, %v507
      %v516 = vmax.f32 %v508, 0.0
      %v517 = vmax.f32 %v509, 0.0
      %v518 = vmax.f32 %v510, 0.0
      %v519 = vmax.f32 %v511, 0.0
      %v520 = vmax.f32 %v512, 0.0
      %v521 = vmax.f32 %v513, 0.0
      %v522 = vmax.f32 %v514, 0.0
      %v523 = vmax.f32 %v515, 0.0
      %v524 = vmul.f32 %v516, %v516
      %v525 = vmul.f32 %v517, %v517
      %v526 = vmul.f32 %v518, %v518
      %v527 = vmul.f32 %v519, %v519
      %v528 = vmul.f32 %v520, %v520
      %v529 = vmul.f32 %v521, %v521
      %v530 = vmul.f32 %v522, %v522
      %v531 = vmul.f32 %v523, %v523
      %v532 = vmul.f32 %v524, %v476
      %v533 = vmul.f32 %v525, %v477
      %v534 = vmul.f32 %v526, %v478
      %v535 = vmul.f32 %v527, %v479
      %v536 = vmul.f32 %v528, %v480
      %v537 = vmul.f32 %v529, %v481
      %v538 = vmul.f32 %v530, %v482
      %v539 = vmul.f32 %v531, %v483
      %vm540 = vcmask 7168
      %v541 = vsel %vm540, %v532, 0.0
      %v542 = vsel %vm540, %v533, 0.0
      %v543 = vadd.f32 %v541, %v542
      %v544 = vsel %vm540, %v534, 0.0
      %v545 = vadd.f32 %v543, %v544
      %v546 = vsel %vm540, %v535, 0.0
      %v547 = vadd.f32 %v545, %v546
      %v548 = vsel %vm540, %v536, 0.0
      %v549 = vadd.f32 %v547, %v548
      %v550 = vsel %vm540, %v537, 0.0
      %v551 = vadd.f32 %v549, %v550
      %v552 = vsel %vm540, %v538, 0.0
      %v553 = vadd.f32 %v551, %v552
      %v554 = vsel %vm540, %v539, 0.0
      %v555 = vadd.f32 %v553, %v554
      %556 = vadd.xlane.f32.xlu0 %v555
      %v557 = vpop.xlane.xlu0 %556
      %v558 = vrot.slane %v557, 4
      %v559 = vadd.f32 %v557, %v558
      %v560 = vrot.slane %v559, 2
      %v561 = vadd.f32 %v559, %v560
      %v562 = vrot.slane %v561, 1
      %v563 = vadd.f32 %v561, %v562
      %s564 = vtos %v563
      %v565 = vstv %s564
      %vm566 = vcmask 0
      %567 = vst.msk [vmem:[%s230] sm:$0x1] %vm566, %v565
      %p568 = scmp.lt.s32.totalorder %s14, 3
      %s569 = scalar_select %p568, %s14, 3
      %s570 = scalar_lea.vmem %s3, %s569
      // Predicated region
      $region33: #{tpu_custom_call.1} parent=31 // pred_check
        %p571 = pneg %p105
      $region34: #{tpu_custom_call.1} parent=31 // pred_check_branch
        %573 = sbr.rel (%p571) target = $region36
      $region35: #{tpu_custom_call.1} parent=31 // pred_region
        _
      $region36: #{tpu_custom_call.1} parent=31 // pred_fallthru
        _
    $region32: #{tpu_custom_call.1} parent=5 // pred_fallthru
      _
    %p574 = scmp.le.s32.totalorder 2, %s9
    // Predicated region
    $region37: #{tpu_custom_call.1} parent=5 // pred_check
      %p575 = pneg %p574
    $region38: #{tpu_custom_call.1} parent=5 // pred_check_branch
      %577 = sbr.rel (%p575) target = $region40
    $region39: #{tpu_custom_call.1} parent=5 // pred_region
      %s578 = ssub.s32 %s9, 2
      // Predicated region
      $region41: #{tpu_custom_call.1} parent=39 // pred_check
        %p579 = pneg %p111
      $region42: #{tpu_custom_call.1} parent=39 // pred_check_branch
        %581 = sbr.rel (%p579) target = $region44
      $region43: #{tpu_custom_call.1} parent=39 // pred_region
        %p582 = scmp.lt.s32.totalorder %s15, 3
        %s583 = scalar_select %p582, %s15, 3
        %s584 = scalar_lea.vmem %s3, %s583
      $region44: #{tpu_custom_call.1} parent=39 // pred_fallthru
        _
    $region40: #{tpu_custom_call.1} parent=5 // pred_fallthru
      _
  $region6: #{tpu_custom_call.1} parent=0 // loop_footer
    %s13 = sadd.s32 1, %s9
  $region7: #{tpu_custom_call.1} parent=0 // loop_footer_branch
    %8 = sbr.rel target = $region3
  $region8: #{tpu_custom_call.1} parent=0 // loop_exit
    _

</llo_original>
